<compile_context>
chip_gen: v6e
topology: v6e:2x2x1
jax: 0.10.0
libtpu: 0.0.40
codegen_flags: <defaults>
</compile_context>

<pallas_src>
import jax
import jax.numpy as jnp
from jax.experimental import pallas as pl
from jax.experimental.pallas import tpu as pltpu

_LANES = 128
_TARGET_BLOCK_BYTES = 2 * 1024 * 1024   # ~2 MiB logits block per grid step
_MAX_TILE_ROWS = 2048                   # hard ceiling on rows per step


def _make_kernel(C, r_tile, tps, rows_valid):
    """Build the kernel with static config baked in via closure."""

    def kernel(inp_ref, tgt_ref, inter_ref, total_ref):
        # inp_ref   : (1, C, r_tile, 128) logits block
        # tgt_ref   : (1, r_tile, 128)    label block (int8 / bf16 / int32)
        # inter_ref : (1, 1, 8, 128) f32  running sum(pred * tgt) for this (n, split)
        # total_ref : (1, 1, 8, 128) f32  running sum(pred + tgt) for this (n, split)
        tid = pl.program_id(2)

        @pl.when(tid == 0)
        def _init():
            inter_ref[...] = jnp.zeros_like(inter_ref)
            total_ref[...] = jnp.zeros_like(total_ref)

        # argmax over channels on raw logits (softmax elided: monotone, ties preserved;
        # strict '>' gives first-max-wins like torch/jnp argmax). Pure VPU compares.
        best = inp_ref[0, 0].astype(jnp.float32)            # (r_tile, 128)
        pred = jnp.zeros_like(best)                          # predicted class as f32
        for c in range(1, C):                                # C is small & static
            v = inp_ref[0, c].astype(jnp.float32)
            gt = v > best
            pred = jnp.where(gt, jnp.float32(c), pred)
            best = jnp.where(gt, v, best)

        tgt = tgt_ref[0].astype(jnp.float32)                 # (r_tile, 128)

        # Mask grid over-coverage (ragged last row tile / clamped split overflow).
        # Cheap iota + 2 selects instead of an XLA-side pad copy of the logits.
        tile_idx = pl.program_id(1) * tps + tid
        row = tile_idx * r_tile + jax.lax.broadcasted_iota(
            jnp.int32, (r_tile, _LANES), 0)
        valid = row < rows_valid
        pred = jnp.where(valid, pred, 0.0)
        tgt = jnp.where(valid, tgt, 0.0)

        # Collapse the tile to an (8,128) vreg-shaped partial sum with VPU adds only
        # (reshape groups whole (8,128) vreg tiles; sum over the leading axis).
        prod = (pred * tgt).reshape(r_tile // 8, 8, _LANES).sum(axis=0)
        tot = (pred + tgt).reshape(r_tile // 8, 8, _LANES).sum(axis=0)
        inter_ref[...] += prod[None, None]
        total_ref[...] += tot[None, None]

    return kernel


def iou_loss(inputs, targets, smooth=1.0, reduction='mean'):
    """inputs: (N, C, H, W) float logits; targets: (N, H, W) integer labels. Scalar f32."""
    N, C, H, W = inputs.shape
    HW = H * W

    rows = -(-HW // _LANES)                 # ceil(HW / 128)
    rows_arr = max(rows, 8)                 # array row dim (>= 8 so blocks fit the array)
    hw_arr = rows_arr * _LANES

    # Adaptive row tile: ~2 MiB logits block, multiple of 8, never exceeding the array.
    itemsize = inputs.dtype.itemsize
    r_adapt = _TARGET_BLOCK_BYTES // (C * _LANES * itemsize)
    r_tile = max(8, min(_MAX_TILE_ROWS, (r_adapt // 8) * 8))
    r_tile = min(r_tile, (rows_arr // 8) * 8)

    nrb = -(-rows_arr // r_tile)            # number of row blocks
    n_split = 2 if nrb >= 2 else 1          # spatial split -> both v7x TCs busy at small N
    tps = -(-nrb // n_split)                # row tiles per split
    last_block = nrb - 1

    # Narrow the targets stream (int8: 4x fewer HBM bytes; bf16 exact for labels < 256).
    if C <= 127:
        tgt_dtype = jnp.int8
    elif C <= 255:
        tgt_dtype = jnp.bfloat16
    else:
        tgt_dtype = jnp.int32

    x = inputs.reshape(N, C, HW)
    t = targets.reshape(N, HW)
    if t.dtype != tgt_dtype:
        t = t.astype(tgt_dtype)
    if hw_arr != HW:
        # Only when HW is not 128-aligned (or the image is tiny): zero logits -> pred = 0
        # (first-max-wins at class 0), zero labels -> tgt = 0, so padded pixels contribute 0.
        x = jnp.pad(x, ((0, 0), (0, 0), (0, hw_arr - HW)))
        t = jnp.pad(t, ((0, 0), (0, hw_arr - HW)))
    x = x.reshape(N, C, rows_arr, _LANES)
    t = t.reshape(N, rows_arr, _LANES)

    kernel = _make_kernel(C, r_tile, tps, rows_arr)

    # Clamp the row-block index so a split-overflow step never issues a fully-OOB DMA;
    # the kernel's row mask zeroes its contribution anyway.
    def x_map(n, s, tt):
        return (n, 0, jnp.minimum(s * tps + tt, last_block), 0)

    def t_map(n, s, tt):
        return (n, jnp.minimum(s * tps + tt, last_block), 0)

    def o_map(n, s, tt):
        return (n, s, 0, 0)

    inter_p, total_p = pl.pallas_call(
        kernel,
        out_shape=(
            jax.ShapeDtypeStruct((N, n_split, 8, _LANES), jnp.float32),  # sum(pred*tgt)
            jax.ShapeDtypeStruct((N, n_split, 8, _LANES), jnp.float32),  # sum(pred+tgt)
        ),
        grid=(N, n_split, tps),
        in_specs=[
            pl.BlockSpec((1, C, r_tile, _LANES), x_map),
            pl.BlockSpec((1, r_tile, _LANES), t_map),
        ],
        out_specs=(
            pl.BlockSpec((1, 1, 8, _LANES), o_map),
            pl.BlockSpec((1, 1, 8, _LANES), o_map),
        ),
        compiler_params=pltpu.CompilerParams(
            dimension_semantics=("parallel", "parallel", "arbitrary"),
            vmem_limit_bytes=32 * 1024 * 1024),
    )(x, t)

    intersection = jnp.sum(inter_p)
    total = jnp.sum(total_p)
    union = total - intersection
    loss = 1.0 - (intersection + smooth) / (union + smooth)
    # reduction on a 0-d value: 'mean' / 'sum' / 'none' are all the same scalar.
    return loss


def _reference(inputs, targets, smooth=1.0):
    pred = jnp.argmax(jax.nn.softmax(inputs, axis=1), axis=1).astype(jnp.float32)
    tgt = targets.astype(jnp.float32)
    inter = jnp.sum(pred * tgt)
    total = jnp.sum(pred + tgt)
    union = total - inter
    return 1.0 - (inter + smooth) / (union + smooth)


if __name__ == "__main__":
    key = jax.random.PRNGKey(0)
    k1, k2, k3, k4 = jax.random.split(key, 4)

    # Case 1: the module's nominal small shape (tiny-image / padded path).
    N, C, H, W = 2, 4, 16, 16
    inputs = jax.random.normal(k1, (N, C, H, W), dtype=jnp.float32)
    targets = jax.random.randint(k2, (N, H, W), 0, C, dtype=jnp.int32)
    loss = jax.block_until_ready(iou_loss(inputs, targets, smooth=1.0, reduction='mean'))
    ref = _reference(inputs, targets, smooth=1.0)
    assert jnp.allclose(loss, ref, rtol=1e-5, atol=1e-5), (loss, ref)

    # Case 2: 128-aligned HW with a ragged last row tile -> exercises the no-pad path,
    # the in-kernel tail mask, the split grid axis, and int8 targets.
    N2, C2, H2, W2 = 2, 4, 48, 48
    inputs2 = jax.random.normal(k3, (N2, C2, H2, W2), dtype=jnp.float32)
    targets2 = jax.random.randint(k4, (N2, H2, W2), 0, C2, dtype=jnp.int32)
    loss2 = jax.block_until_ready(iou_loss(inputs2, targets2, smooth=1.0, reduction='mean'))
    ref2 = _reference(inputs2, targets2, smooth=1.0)
    assert jnp.allclose(loss2, ref2, rtol=1e-5, atol=1e-5), (loss2, ref2)

    print("KERNEL_OK")
</pallas_src>

<mosaic_0001>
module attributes {stable_mosaic.version = 11 : i64} {
  func.func @kernel(%arg0: i32, %arg1: i32, %arg2: i32, %arg3: memref<1x4x8x128xf32, #tpu.memory_space<vmem>>, %arg4: memref<1x8x128xi8, #tpu.memory_space<vmem>>, %arg5: memref<1x1x8x128xf32, #tpu.memory_space<vmem>>, %arg6: memref<1x1x8x128xf32, #tpu.memory_space<vmem>>) attributes {dimension_semantics = [#tpu.dimension_semantics<parallel>, #tpu.dimension_semantics<parallel>, #tpu.dimension_semantics<arbitrary>], iteration_bounds = array<i64: 2, 1, 1>, scalar_prefetch = 0 : i64, scratch_operands = 0 : i64, tpu.core_type = #tpu.core_type<tc>, window_params = [{transform_indices = @transform_0, window_bounds = array<i64: 1, 4, 8, 128>}, {transform_indices = @transform_1, window_bounds = array<i64: 1, 8, 128>}, {transform_indices = @transform_2, window_bounds = array<i64: 1, 1, 8, 128>}, {transform_indices = @transform_3, window_bounds = array<i64: 1, 1, 8, 128>}]} {
    %c0_i32 = arith.constant 0 : i32
    %0 = arith.cmpi eq, %arg2, %c0_i32 : i32
    %1 = arith.extui %0 : i1 to i32
    %c0_i32_0 = arith.constant 0 : i32
    %2 = arith.cmpi ne, %1, %c0_i32_0 : i32
    scf.if %2 {
      %cst_40 = arith.constant 0.000000e+00 : f32
      %52 = vector.broadcast %cst_40 : f32 to vector<1x1x8x128xf32>
      %c0_41 = arith.constant 0 : index
      %c0_42 = arith.constant 0 : index
      %c0_43 = arith.constant 0 : index
      %c0_44 = arith.constant 0 : index
      %53 = vector.load %arg5[%c0_41, %c0_42, %c0_43, %c0_44] : memref<1x1x8x128xf32, #tpu.memory_space<vmem>>, vector<1x1x8x128xf32>
      tpu.vector_store %arg5[%c0_41, %c0_42, %c0_43, %c0_44], %52 {strides = array<i32>} : memref<1x1x8x128xf32, #tpu.memory_space<vmem>>, vector<1x1x8x128xf32>,
      %cst_45 = arith.constant 0.000000e+00 : f32
      %54 = vector.broadcast %cst_45 : f32 to vector<1x1x8x128xf32>
      %c0_46 = arith.constant 0 : index
      %c0_47 = arith.constant 0 : index
      %c0_48 = arith.constant 0 : index
      %c0_49 = arith.constant 0 : index
      %55 = vector.load %arg6[%c0_46, %c0_47, %c0_48, %c0_49] : memref<1x1x8x128xf32, #tpu.memory_space<vmem>>, vector<1x1x8x128xf32>
      tpu.vector_store %arg6[%c0_46, %c0_47, %c0_48, %c0_49], %54 {strides = array<i32>} : memref<1x1x8x128xf32, #tpu.memory_space<vmem>>, vector<1x1x8x128xf32>,
    } else {
    }
    %c0 = arith.constant 0 : index
    %c0_1 = arith.constant 0 : index
    %c0_2 = arith.constant 0 : index
    %c0_3 = arith.constant 0 : index
    %3 = vector.load %arg3[%c0, %c0_1, %c0_2, %c0_3] : memref<1x4x8x128xf32, #tpu.memory_space<vmem>>, vector<1x1x8x128xf32>
    %4 = vector.shape_cast %3 : vector<1x1x8x128xf32> to vector<8x128xf32>
    %cst = arith.constant 0.000000e+00 : f32
    %5 = vector.broadcast %cst : f32 to vector<8x128xf32>
    %c0_4 = arith.constant 0 : index
    %c1 = arith.constant 1 : index
    %c0_5 = arith.constant 0 : index
    %c0_6 = arith.constant 0 : index
    %6 = vector.load %arg3[%c0_4, %c1, %c0_5, %c0_6] : memref<1x4x8x128xf32, #tpu.memory_space<vmem>>, vector<1x1x8x128xf32>
    %7 = vector.shape_cast %6 : vector<1x1x8x128xf32> to vector<8x128xf32>
    %8 = arith.cmpf ogt, %7, %4 : vector<8x128xf32>
    %cst_7 = arith.constant 1.000000e+00 : f32
    %9 = vector.broadcast %cst_7 : f32 to vector<8x128xf32>
    %10 = arith.select %8, %9, %5 : vector<8x128xi1>, vector<8x128xf32>
    %11 = arith.select %8, %7, %4 : vector<8x128xi1>, vector<8x128xf32>
    %c0_8 = arith.constant 0 : index
    %c2 = arith.constant 2 : index
    %c0_9 = arith.constant 0 : index
    %c0_10 = arith.constant 0 : index
    %12 = vector.load %arg3[%c0_8, %c2, %c0_9, %c0_10] : memref<1x4x8x128xf32, #tpu.memory_space<vmem>>, vector<1x1x8x128xf32>
    %13 = vector.shape_cast %12 : vector<1x1x8x128xf32> to vector<8x128xf32>
    %14 = arith.cmpf ogt, %13, %11 : vector<8x128xf32>
    %cst_11 = arith.constant 2.000000e+00 : f32
    %15 = vector.broadcast %cst_11 : f32 to vector<8x128xf32>
    %16 = arith.select %14, %15, %10 : vector<8x128xi1>, vector<8x128xf32>
    %17 = arith.select %14, %13, %11 : vector<8x128xi1>, vector<8x128xf32>
    %c0_12 = arith.constant 0 : index
    %c3 = arith.constant 3 : index
    %c0_13 = arith.constant 0 : index
    %c0_14 = arith.constant 0 : index
    %18 = vector.load %arg3[%c0_12, %c3, %c0_13, %c0_14] : memref<1x4x8x128xf32, #tpu.memory_space<vmem>>, vector<1x1x8x128xf32>
    %19 = vector.shape_cast %18 : vector<1x1x8x128xf32> to vector<8x128xf32>
    %20 = arith.cmpf ogt, %19, %17 : vector<8x128xf32>
    %cst_15 = arith.constant 3.000000e+00 : f32
    %21 = vector.broadcast %cst_15 : f32 to vector<8x128xf32>
    %22 = arith.select %20, %21, %16 : vector<8x128xi1>, vector<8x128xf32>
    %c0_16 = arith.constant 0 : index
    %c0_17 = arith.constant 0 : index
    %c0_18 = arith.constant 0 : index
    %23 = vector.load %arg4[%c0_16, %c0_17, %c0_18] : memref<1x8x128xi8, #tpu.memory_space<vmem>>, vector<1x8x128xi8>
    %24 = vector.shape_cast %23 : vector<1x8x128xi8> to vector<8x128xi8>
    %25 = arith.sitofp %24 : vector<8x128xi8> to vector<8x128xf32>
    %c1_i32 = arith.constant 1 : i32
    %26 = arith.muli %arg1, %c1_i32 : i32
    %27 = arith.addi %26, %arg2 : i32
    %c8_i32 = arith.constant 8 : i32
    %28 = arith.muli %27, %c8_i32 : i32
    %29 = tpu.iota {dimensions = array<i32: 0>} : vector<8x128xi32>
    %30 = vector.broadcast %28 : i32 to vector<8x128xi32>
    %31 = arith.addi %30, %29 : vector<8x128xi32>
    %c8_i32_19 = arith.constant 8 : i32
    %32 = vector.broadcast %c8_i32_19 : i32 to vector<8x128xi32>
    %33 = arith.cmpi slt, %31, %32 : vector<8x128xi32>
    %cst_20 = arith.constant 0.000000e+00 : f32
    %34 = vector.broadcast %cst_20 : f32 to vector<8x128xf32>
    %35 = arith.select %33, %22, %34 : vector<8x128xi1>, vector<8x128xf32>
    %cst_21 = arith.constant 0.000000e+00 : f32
    %36 = vector.broadcast %cst_21 : f32 to vector<8x128xf32>
    %37 = arith.select %33, %25, %36 : vector<8x128xi1>, vector<8x128xf32>
    %38 = arith.mulf %35, %37 : vector<8x128xf32>
    %39 = vector.shape_cast %38 : vector<8x128xf32> to vector<1x8x128xf32>
    %cst_22 = arith.constant dense<0.000000e+00> : vector<8x128xf32>
    %40 = vector.multi_reduction <add>, %39, %cst_22 [0] : vector<1x8x128xf32> to vector<8x128xf32>
    %41 = arith.addf %35, %37 : vector<8x128xf32>
    %42 = vector.shape_cast %41 : vector<8x128xf32> to vector<1x8x128xf32>
    %cst_23 = arith.constant dense<0.000000e+00> : vector<8x128xf32>
    %43 = vector.multi_reduction <add>, %42, %cst_23 [0] : vector<1x8x128xf32> to vector<8x128xf32>
    %c0_24 = arith.constant 0 : index
    %c0_25 = arith.constant 0 : index
    %c0_26 = arith.constant 0 : index
    %c0_27 = arith.constant 0 : index
    %44 = vector.load %arg5[%c0_24, %c0_25, %c0_26, %c0_27] : memref<1x1x8x128xf32, #tpu.memory_space<vmem>>, vector<1x1x8x128xf32>
    %45 = vector.shape_cast %40 : vector<8x128xf32> to vector<1x1x8x128xf32>
    %46 = arith.addf %44, %45 : vector<1x1x8x128xf32>
    %c0_28 = arith.constant 0 : index
    %c0_29 = arith.constant 0 : index
    %c0_30 = arith.constant 0 : index
    %c0_31 = arith.constant 0 : index
    %47 = vector.load %arg5[%c0_28, %c0_29, %c0_30, %c0_31] : memref<1x1x8x128xf32, #tpu.memory_space<vmem>>, vector<1x1x8x128xf32>
    tpu.vector_store %arg5[%c0_28, %c0_29, %c0_30, %c0_31], %46 {strides = array<i32>} : memref<1x1x8x128xf32, #tpu.memory_space<vmem>>, vector<1x1x8x128xf32>,
    %c0_32 = arith.constant 0 : index
    %c0_33 = arith.constant 0 : index
    %c0_34 = arith.constant 0 : index
    %c0_35 = arith.constant 0 : index
    %48 = vector.load %arg6[%c0_32, %c0_33, %c0_34, %c0_35] : memref<1x1x8x128xf32, #tpu.memory_space<vmem>>, vector<1x1x8x128xf32>
    %49 = vector.shape_cast %43 : vector<8x128xf32> to vector<1x1x8x128xf32>
    %50 = arith.addf %48, %49 : vector<1x1x8x128xf32>
    %c0_36 = arith.constant 0 : index
    %c0_37 = arith.constant 0 : index
    %c0_38 = arith.constant 0 : index
    %c0_39 = arith.constant 0 : index
    %51 = vector.load %arg6[%c0_36, %c0_37, %c0_38, %c0_39] : memref<1x1x8x128xf32, #tpu.memory_space<vmem>>, vector<1x1x8x128xf32>
    tpu.vector_store %arg6[%c0_36, %c0_37, %c0_38, %c0_39], %50 {strides = array<i32>} : memref<1x1x8x128xf32, #tpu.memory_space<vmem>>, vector<1x1x8x128xf32>,
    return
  }
  func.func @transform_0(%arg0: i32, %arg1: i32, %arg2: i32) -> (i32, i32, i32, i32) {
    %c1_i32 = arith.constant 1 : i32
    %0 = arith.muli %arg1, %c1_i32 : i32
    %1 = arith.addi %0, %arg2 : i32
    %c0_i32 = arith.constant 0 : i32
    %2 = arith.minsi %1, %c0_i32 : i32
    %c0_i32_0 = arith.constant 0 : i32
    %c0_i32_1 = arith.constant 0 : i32
    %c0_i32_2 = arith.constant 0 : i32
    return %arg0, %c0_i32_0, %2, %c0_i32_1 : i32, i32, i32, i32
  }
  func.func @transform_1(%arg0: i32, %arg1: i32, %arg2: i32) -> (i32, i32, i32) {
    %c1_i32 = arith.constant 1 : i32
    %0 = arith.muli %arg1, %c1_i32 : i32
    %1 = arith.addi %0, %arg2 : i32
    %c0_i32 = arith.constant 0 : i32
    %2 = arith.minsi %1, %c0_i32 : i32
    %c0_i32_0 = arith.constant 0 : i32
    %c0_i32_1 = arith.constant 0 : i32
    return %arg0, %2, %c0_i32_0 : i32, i32, i32
  }
  func.func @transform_2(%arg0: i32, %arg1: i32, %arg2: i32) -> (i32, i32, i32, i32) {
    %c0_i32 = arith.constant 0 : i32
    %c0_i32_0 = arith.constant 0 : i32
    %c0_i32_1 = arith.constant 0 : i32
    return %arg0, %arg1, %c0_i32, %c0_i32_0 : i32, i32, i32, i32
  }
  func.func @transform_3(%arg0: i32, %arg1: i32, %arg2: i32) -> (i32, i32, i32, i32) {
    %c0_i32 = arith.constant 0 : i32
    %c0_i32_0 = arith.constant 0 : i32
    %c0_i32_1 = arith.constant 0 : i32
    return %arg0, %arg1, %c0_i32, %c0_i32_0 : i32, i32, i32, i32
  }
}

</mosaic_0001>

<llo_original>
// kernel: tpu_custom_call.1
$region0: #{tpu_custom_call.1}
  #allocation0 [shape = 'u32[]', space=smem, size = 0x4, offset = 0x4, fixed_abs, tag = 'smem constant byte address 0x4 - core index']
  #allocation1 [shape = 'u32[144,128]{1,0:T(1,128)}', space=vmem, size = 0x12000, scoped, tag = 'internal scratch']
  %s0 = inlined_call_operand.hbm [shape: f32[2,4,8,128], index: 0, kind: input, shape index: {}]
  %s1 = inlined_call_operand.hbm [shape: s8[2,8,128], index: 1, kind: input, shape index: {}]
  %s2 = inlined_call_operand.hbm [shape: f32[2,1,8,128], index: 2, kind: output, shape index: {0}]
  %s3 = inlined_call_operand.hbm [shape: f32[2,1,8,128], index: 3, kind: output, shape index: {1}]
  %4 = xla_tuple %s2, %s3
  %s5 = sld [smem:[#allocation0]]
  $region61: #{tpu_custom_call.1} parent=0
    _
  %s7 = ssub.s32 1, %s5
  %s8 = scalar_select 0, %s7, %s5
  $region1: #{tpu_custom_call.1} parent=0
    #allocation2 [shape = 'u8[32768]{0}', space=vmem, size = 0x8000, scoped, tag = 'input window, operand 0']
    #allocation3 [shape = 's32[2]{0}', space=sflag, size = 0x8, scoped, tag = 'scoped memory for tpu_custom_call.1']
    #allocation4 [shape = 's32[2]{0}', space=sflag, size = 0x8, scoped, tag = 'scoped memory for tpu_custom_call.1']
    #allocation5 [shape = 'u8[2048]{0}', space=vmem, size = 0x800, scoped, tag = 'input window, operand 1']
    #allocation6 [shape = 's32[2]{0}', space=sflag, size = 0x8, scoped, tag = 'scoped memory for tpu_custom_call.1']
    #allocation7 [shape = 'u8[8192]{0}', space=vmem, size = 0x2000, scoped, tag = 'output window, operand 0']
    #allocation8 [shape = 'u8[8192]{0}', space=vmem, size = 0x2000, scoped, tag = 'output window, operand 1']
    #allocation9 [shape = 's32[2]{0}', space=sflag, size = 0x8, scoped, tag = 'scoped memory for tpu_custom_call.1']
    %9 = vsyncpa [#allocation3], 0
    %s10 = scalar_lea.sflag [#allocation3], 1
    %11 = vsyncpa %s10, 0
    %12 = vsyncpa [#allocation6], 0
    %s13 = scalar_lea.sflag [#allocation6], 1
    %14 = vsyncpa %s13, 0
    %15 = vsyncpa [#allocation4], 0
    %s16 = scalar_lea.sflag [#allocation4], 1
    %17 = vsyncpa %s16, 0
    %18 = vsyncpa [#allocation9], 0
    %s19 = scalar_lea.sflag [#allocation9], 1
    %20 = vsyncpa %s19, 0
    loop: start=0, step=1, limit=4
    $region2: #{tpu_custom_call.1} parent=1 // loop_pre_header
      _
    $region3: #{tpu_custom_call.1} parent=1 // loop_header
      %s22 = sphi 0, %s26
      %p23 = scmp.ge.s32.totalorder %s22, 4
      %s29 = sphi 0, %s48
      %s30 = sphi 0, %s44
      %s31 = sphi 0, %s40
      %s32 = sphi 0, %s29
      %s33 = sphi 0, %s30
      %s34 = sphi 0, %s31
      %s35 = sphi 0, %s32
      %s36 = sphi 0, %s33
      %s37 = sphi 0, %s34
      %s59 = sphi 0, %s61
      %s62 = sphi 0, %s59
      %s63 = sphi 0, %s62
      %s79 = sphi 0, %s63
      %s93 = sphi 0, %s95
      %s96 = sphi 0, %s93
      %s97 = sphi 0, %s96
      %s113 = sphi 0, %s97
      %s121 = sphi 0, %s123
      %s124 = sphi 0, %s121
      %s125 = sphi 0, %s124
      %s141 = sphi 0, %s125
      %s149 = sphi 0, %s151
      %s152 = sphi 0, %s149
      %s153 = sphi 0, %s152
      %s169 = sphi 0, %s153
    $region4: #{tpu_custom_call.1} parent=1 // loop_header_branch
      %25 = sbr.rel (%p23) target = $region8
    $region5: #{tpu_custom_call.1} parent=1 // loop_body
      %s27 = ssub.s32 %s22, 1
      %s28 = ssub.s32 %s22, 2
      %s38 = sadd.s32 1, %s31
      %p39 = scmp.ge.s32.totalorder %s38, 1
      %s40 = scalar_select %p39, 0, %s38
      %s41 = sadd.s32 1, %s30
      %s42 = scalar_select %p39, %s41, %s30
      %p43 = scmp.ge.s32.totalorder %s42, 1
      %s44 = scalar_select %p43, 0, %s42
      %s45 = sadd.s32 1, %s29
      %s46 = scalar_select %p43, %s45, %s29
      %p47 = scmp.ge.s32.totalorder %s46, 2
      %s48 = scalar_select %p47, 0, %s46
      %s49 = sadd.s32 %s30, %s31
      %p50 = scmp.lt.s32.totalorder %s49, 0
      %s51 = scalar_select %p50, %s49, 0
      %s52 = sadd.s32 %s44, %s40
      %p53 = scmp.lt.s32.totalorder %s52, 0
      %s54 = scalar_select %p53, %s52, 0
      %s55 = ssub.s32 %s29, %s48
      %s56 = ssub.s32 %s51, %s54
      %s57 = sor.u32 %s55, %s56
      %p58 = scmp.eq.s32.totalorder %s57, 0
      %s60 = sadd.s32 %s59, 1
      %s61 = scalar_select %p58, %s59, %s60
      %p64 = pneg %p58
      %p65 = scmp.eq.s32.totalorder %s22, 1
      %p66 = por %p64, %p65
      %p67 = scmp.ne.s32.totalorder %s59, %s62
      %p68 = scmp.eq.s32.totalorder %s22, 0
      %p69 = por %p67, %p68
      %p70 = scmp.ne.s32.totalorder %s59, %s62
      %p71 = scmp.eq.s32.totalorder %s27, 1
      %p72 = por %p70, %p71
      %p73 = scmp.ne.s32.totalorder %s62, %s63
      %p74 = scmp.eq.s32.totalorder %s27, 0
      %p75 = por %p73, %p74
      %p76 = scmp.ne.s32.totalorder %s62, %s63
      %p77 = scmp.eq.s32.totalorder %s28, 1
      %p78 = por %p76, %p77
      %p80 = scmp.ne.s32.totalorder %s63, %s79
      %p81 = scmp.eq.s32.totalorder %s28, 0
      %p82 = por %p80, %p81
      %s83 = sadd.s32 %s30, %s31
      %p84 = scmp.lt.s32.totalorder %s83, 0
      %s85 = scalar_select %p84, %s83, 0
      %s86 = sadd.s32 %s44, %s40
      %p87 = scmp.lt.s32.totalorder %s86, 0
      %s88 = scalar_select %p87, %s86, 0
      %s89 = ssub.s32 %s29, %s48
      %s90 = ssub.s32 %s85, %s88
      %s91 = sor.u32 %s89, %s90
      %p92 = scmp.eq.s32.totalorder %s91, 0
      %s94 = sadd.s32 %s93, 1
      %s95 = scalar_select %p92, %s93, %s94
      %p98 = pneg %p92
      %p99 = scmp.eq.s32.totalorder %s22, 1
      %p100 = por %p98, %p99
      %p101 = scmp.ne.s32.totalorder %s93, %s96
      %p102 = scmp.eq.s32.totalorder %s22, 0
      %p103 = por %p101, %p102
      %p104 = scmp.ne.s32.totalorder %s93, %s96
      %p105 = scmp.eq.s32.totalorder %s27, 1
      %p106 = por %p104, %p105
      %p107 = scmp.ne.s32.totalorder %s96, %s97
      %p108 = scmp.eq.s32.totalorder %s27, 0
      %p109 = por %p107, %p108
      %p110 = scmp.ne.s32.totalorder %s96, %s97
      %p111 = scmp.eq.s32.totalorder %s28, 1
      %p112 = por %p110, %p111
      %p114 = scmp.ne.s32.totalorder %s97, %s113
      %p115 = scmp.eq.s32.totalorder %s28, 0
      %p116 = por %p114, %p115
      %s117 = ssub.s32 %s29, %s48
      %s118 = ssub.s32 %s30, %s44
      %s119 = sor.u32 %s117, %s118
      %p120 = scmp.eq.s32.totalorder %s119, 0
      %s122 = sadd.s32 %s121, 1
      %s123 = scalar_select %p120, %s121, %s122
      %p126 = pneg %p120
      %p127 = scmp.eq.s32.totalorder %s22, 1
      %p128 = por %p126, %p127
      %p129 = scmp.ne.s32.totalorder %s121, %s124
      %p130 = scmp.eq.s32.totalorder %s22, 0
      %p131 = por %p129, %p130
      %p132 = scmp.ne.s32.totalorder %s121, %s124
      %p133 = scmp.eq.s32.totalorder %s27, 1
      %p134 = por %p132, %p133
      %p135 = scmp.ne.s32.totalorder %s124, %s125
      %p136 = scmp.eq.s32.totalorder %s27, 0
      %p137 = por %p135, %p136
      %p138 = scmp.ne.s32.totalorder %s124, %s125
      %p139 = scmp.eq.s32.totalorder %s28, 1
      %p140 = por %p138, %p139
      %p142 = scmp.ne.s32.totalorder %s125, %s141
      %p143 = scmp.eq.s32.totalorder %s28, 0
      %p144 = por %p142, %p143
      %s145 = ssub.s32 %s29, %s48
      %s146 = ssub.s32 %s30, %s44
      %s147 = sor.u32 %s145, %s146
      %p148 = scmp.eq.s32.totalorder %s147, 0
      %s150 = sadd.s32 %s149, 1
      %s151 = scalar_select %p148, %s149, %s150
      %p154 = pneg %p148
      %p155 = scmp.eq.s32.totalorder %s22, 1
      %p156 = por %p154, %p155
      %p157 = scmp.ne.s32.totalorder %s149, %s152
      %p158 = scmp.eq.s32.totalorder %s22, 0
      %p159 = por %p157, %p158
      %p160 = scmp.ne.s32.totalorder %s149, %s152
      %p161 = scmp.eq.s32.totalorder %s27, 1
      %p162 = por %p160, %p161
      %p163 = scmp.ne.s32.totalorder %s152, %s153
      %p164 = scmp.eq.s32.totalorder %s27, 0
      %p165 = por %p163, %p164
      %p166 = scmp.ne.s32.totalorder %s152, %s153
      %p167 = scmp.eq.s32.totalorder %s28, 1
      %p168 = por %p166, %p167
      %p170 = scmp.ne.s32.totalorder %s153, %s169
      %p171 = scmp.eq.s32.totalorder %s28, 0
      %p172 = por %p170, %p171
      %p173 = scmp.le.s32.totalorder 1, %s22
      %p174 = scmp.lt.s32.totalorder %s22, 3
      %p175 = pnand %p173, %p174
      %p176 = pneg %p175
      // Predicated region
      $region9: #{tpu_custom_call.1} parent=5 // pred_check
        _
      $region10: #{tpu_custom_call.1} parent=5 // pred_check_branch
        %178 = sbr.rel (%p175) target = $region12
      $region11: #{tpu_custom_call.1} parent=5 // pred_region
        %s179 = ssub.s32 %s22, 1
      $region12: #{tpu_custom_call.1} parent=5 // pred_fallthru
        _
      %p180 = scmp.lt.s32.totalorder %s22, 2
      // Predicated region
      $region13: #{tpu_custom_call.1} parent=5 // pred_check
        %p181 = pneg %p180
      $region14: #{tpu_custom_call.1} parent=5 // pred_check_branch
        %183 = sbr.rel (%p181) target = $region16
      $region15: #{tpu_custom_call.1} parent=5 // pred_region
        // Predicated region
        $region17: #{tpu_custom_call.1} parent=15 // pred_check
          %p184 = pneg %p69
        $region18: #{tpu_custom_call.1} parent=15 // pred_check_branch
          %186 = sbr.rel (%p184) target = $region20
        $region19: #{tpu_custom_call.1} parent=15 // pred_region
          %s187 = sand.u32 %s59, 1
          %s188 = scalar_lea.sflag [#allocation3], %s187
          %s189 = sand.u32 %s59, 1
          %s190 = smul.addr %s189, 32
          %s191 = scalar_lea.vmem [#allocation2], %s190
          %s192 = sadd.s32 %s30, %s31
          %p193 = scmp.lt.s32.totalorder %s192, 0
          %s194 = scalar_select %p193, %s192, 0
          %s196 = ssub.s32 512, 512
          %197 = vsyncadd %s188, %s196
          %s198 = smul.addr %s29, 4
          %s199 = sadd.s32 %s194, %s198
          %s200 = smul.addr %s199, 128
          %s201 = scalar_lea.hbm %s0, %s200
          %s202 = sshll.u32 %s191, 4
          %s203 = int_to_ptr.vmem [resolvable:$true] %s202
          %208 = dma.hbm_to_vmem [thread:$0]  %s201, 512, %s203, %s188, 128, 128, 8
        $region20: #{tpu_custom_call.1} parent=15 // pred_fallthru
          _
        // Predicated region
        $region21: #{tpu_custom_call.1} parent=15 // pred_check
          %p209 = pneg %p103
        $region22: #{tpu_custom_call.1} parent=15 // pred_check_branch
          %211 = sbr.rel (%p209) target = $region24
        $region23: #{tpu_custom_call.1} parent=15 // pred_region
          %s212 = sand.u32 %s93, 1
          %s213 = scalar_lea.sflag [#allocation6], %s212
          %s214 = sand.u32 %s93, 1
          %s215 = smul.addr %s214, 2
          %s216 = scalar_lea.vmem [#allocation5], %s215
          %s217 = sadd.s32 %s30, %s31
          %p218 = scmp.lt.s32.totalorder %s217, 0
          %s219 = scalar_select %p218, %s217, 0
          %s221 = ssub.s32 32, 32
          %222 = vsyncadd %s213, %s221
          %s223 = sadd.s32 %s219, %s29
          %s224 = smul.addr %s223, 32
          %s225 = scalar_lea.hbm %s1, %s224
          %s227 = sshll.u32 %s216, 4
          %s228 = int_to_ptr.vmem [resolvable:$true] %s227
          %230 = dma.hbm_to_vmem [thread:$0]  %s225, 32, %s228, %s213
        $region24: #{tpu_custom_call.1} parent=15 // pred_fallthru
          _
      $region16: #{tpu_custom_call.1} parent=5 // pred_fallthru
        _
      %p231 = scmp.le.s32.totalorder 1, %s22
      %p232 = scmp.lt.s32.totalorder %s22, 3
      %p233 = pnand %p231, %p232
      %p234 = pneg %p233
      // Predicated region
      $region25: #{tpu_custom_call.1} parent=5 // pred_check
        _
      $region26: #{tpu_custom_call.1} parent=5 // pred_check_branch
        %236 = sbr.rel (%p233) target = $region28
      $region27: #{tpu_custom_call.1} parent=5 // pred_region
        %s237 = ssub.s32 %s22, 1
        %s238 = sand.u32 %s62, 1
        %s239 = scalar_lea.sflag [#allocation3], %s238
        %s240 = sand.u32 %s62, 1
        %s241 = smul.addr %s240, 32
        %s242 = scalar_lea.vmem [#allocation2], %s241
        // Predicated region
        $region29: #{tpu_custom_call.1} parent=27 // pred_check
          %p243 = pneg %p75
        $region30: #{tpu_custom_call.1} parent=27 // pred_check_branch
          %245 = sbr.rel (%p243) target = $region32
        $region31: #{tpu_custom_call.1} parent=27 // pred_region
          %246 = dma.done %s239, 512
        $region32: #{tpu_custom_call.1} parent=27 // pred_fallthru
          _
        %s247 = sand.u32 %s96, 1
        %s248 = scalar_lea.sflag [#allocation6], %s247
        %s249 = sand.u32 %s96, 1
        %s250 = smul.addr %s249, 2
        %s251 = scalar_lea.vmem [#allocation5], %s250
        // Predicated region
        $region33: #{tpu_custom_call.1} parent=27 // pred_check
          %p252 = pneg %p109
        $region34: #{tpu_custom_call.1} parent=27 // pred_check_branch
          %254 = sbr.rel (%p252) target = $region36
        $region35: #{tpu_custom_call.1} parent=27 // pred_region
          %255 = dma.done %s248, 32
        $region36: #{tpu_custom_call.1} parent=27 // pred_fallthru
          _
        %s256 = sand.u32 %s62, 1
        %s257 = scalar_lea.sflag [#allocation3], %s256
        %s258 = sand.u32 %s62, 1
        %s259 = smul.addr %s258, 32
        %s260 = scalar_lea.vmem [#allocation2], %s259
        %p261 = pneg %p75
        %p262 = pneg %p72
        %s263 = sand.u32 %s96, 1
        %s264 = scalar_lea.sflag [#allocation6], %s263
        %s265 = sand.u32 %s96, 1
        %s266 = smul.addr %s265, 2
        %s267 = scalar_lea.vmem [#allocation5], %s266
        %p268 = pneg %p109
        %p269 = pneg %p106
        %p270 = pneg %p137
        %p271 = pneg %p134
        %s272 = sand.u32 %s124, 1
        %s273 = scalar_lea.sflag [#allocation4], %s272
        %s274 = sand.u32 %s124, 1
        %s275 = smul.addr %s274, 8
        %s276 = scalar_lea.vmem [#allocation7], %s275
        %p277 = pneg %p165
        %p278 = pneg %p162
        %s279 = sand.u32 %s152, 1
        %s280 = scalar_lea.sflag [#allocation9], %s279
        %s281 = sand.u32 %s152, 1
        %s282 = smul.addr %s281, 8
        %s283 = scalar_lea.vmem [#allocation8], %s282
        %s284 = sadd.s32 %s33, %s34
        %p285 = scmp.lt.s32.totalorder %s284, 0
        %s286 = scalar_select %p285, %s284, 0
        %s287 = sadd.s32 %s33, %s34
        %p288 = scmp.lt.s32.totalorder %s287, 0
        %s289 = scalar_select %p288, %s287, 0
        %p290 = scmp.eq.s32.totalorder %s34, 0
        // Predicated region
        $region37: #{tpu_custom_call.1} parent=27 // pred_check
          %p291 = pneg %p290
        $region38: #{tpu_custom_call.1} parent=27 // pred_check_branch
          %293 = sbr.rel (%p291) target = $region40
        $region39: #{tpu_custom_call.1} parent=27 // pred_region
          %294 = vst [vmem:[%s276] sm:$0xff] 0.0
          %295 = vst [vmem:[%s283] sm:$0xff] 0.0
        $region40: #{tpu_custom_call.1} parent=27 // pred_fallthru
          _
        %v296 = vld [vmem:[%s242] sm:$0xff]
        %s297 = scalar_lea.vmem %s242, 8 [#allocation2]
        %v298 = vld [vmem:[%s297] sm:$0xff]
        %vm299 = vcmp.gt.f32.partialorder %v298, %v296
        %v300 = vsel %vm299, 1.0, 0.0
        %v301 = vsel %vm299, %v298, %v296
        %s302 = scalar_lea.vmem %s242, 16 [#allocation2]
        %v303 = vld [vmem:[%s302] sm:$0xff]
        %vm304 = vcmp.gt.f32.partialorder %v303, %v301
        %v305 = vsel %vm304, 2.0, %v300
        %v306 = vsel %vm304, %v303, %v301
        %s307 = scalar_lea.vmem %s242, 24 [#allocation2]
        %v308 = vld [vmem:[%s307] sm:$0xff]
        %vm309 = vcmp.gt.f32.partialorder %v308, %v306
        %v310 = vsel %vm309, 3.0, %v305
        %v311 = vld [vmem:[%s251] sm:$0x3]
        %v312 = vunpack.c.0.s8 %v311
        %v313 = vcvt.s32.f32 %v312
        %s314 = sadd.s32 %s33, %s34
        %s315 = smul.u32 %s314, 8
        %v316 = vlaneseq
        %v317 = vshrl.u32 %v316, 7
        %v318 = vstv %s315
        %v319 = vadd.s32 %v318, %v317
        %vm320 = vcmp.lt.s32.totalorder %v319, 8
        %v321 = vsel %vm320, %v310, 0.0
        %v322 = vsel %vm320, %v313, 0.0
        %v323 = vmul.f32 %v321, %v322
        %v324 = vadd.f32 %v323, 0.0
        %v325 = vadd.f32 %v321, %v322
        %v326 = vadd.f32 %v325, 0.0
        %v327 = vld [vmem:[%s276] sm:$0xff]
        %v328 = vadd.f32 %v327, %v324
        %329 = vst [vmem:[%s276] sm:$0xff] %v328
        %v330 = vld [vmem:[%s283] sm:$0xff]
        %v331 = vadd.f32 %v330, %v326
        %332 = vst [vmem:[%s283] sm:$0xff] %v331
        %s333 = sand.u32 %s124, 1
        %s334 = scalar_lea.sflag [#allocation4], %s333
        %s335 = sand.u32 %s124, 1
        %s336 = smul.addr %s335, 8
        %s337 = scalar_lea.vmem [#allocation7], %s336
        %s338 = sand.u32 %s152, 1
        %s339 = scalar_lea.sflag [#allocation9], %s338
        %s340 = sand.u32 %s152, 1
        %s341 = smul.addr %s340, 8
        %s342 = scalar_lea.vmem [#allocation8], %s341
        // Predicated region
        $region41: #{tpu_custom_call.1} parent=27 // pred_check
          %p343 = pneg %p134
        $region42: #{tpu_custom_call.1} parent=27 // pred_check_branch
          %345 = sbr.rel (%p343) target = $region44
        $region43: #{tpu_custom_call.1} parent=27 // pred_region
          %s347 = ssub.s32 128, 128
          %348 = vsyncadd %s334, %s347
          %s349 = sadd.s32 %s33, %s32
          %s350 = smul.addr %s349, 128
          %s351 = scalar_lea.hbm %s2, %s350
          %s353 = sshll.u32 %s337, 4
          %s354 = int_to_ptr.vmem [resolvable:$true] %s353
          %356 = dma.vmem_to_hbm [thread:$0]  %s354, 128, %s351, %s334
        $region44: #{tpu_custom_call.1} parent=27 // pred_fallthru
          _
        // Predicated region
        $region45: #{tpu_custom_call.1} parent=27 // pred_check
          %p357 = pneg %p162
        $region46: #{tpu_custom_call.1} parent=27 // pred_check_branch
          %359 = sbr.rel (%p357) target = $region48
        $region47: #{tpu_custom_call.1} parent=27 // pred_region
          %s361 = ssub.s32 128, 128
          %362 = vsyncadd %s339, %s361
          %s363 = sadd.s32 %s33, %s32
          %s364 = smul.addr %s363, 128
          %s365 = scalar_lea.hbm %s3, %s364
          %s367 = sshll.u32 %s342, 4
          %s368 = int_to_ptr.vmem [resolvable:$true] %s367
          %370 = dma.vmem_to_hbm [thread:$0]  %s368, 128, %s365, %s339
        $region48: #{tpu_custom_call.1} parent=27 // pred_fallthru
          _
      $region28: #{tpu_custom_call.1} parent=5 // pred_fallthru
        _
      %p371 = scmp.le.s32.totalorder 2, %s22
      // Predicated region
      $region49: #{tpu_custom_call.1} parent=5 // pred_check
        %p372 = pneg %p371
      $region50: #{tpu_custom_call.1} parent=5 // pred_check_branch
        %374 = sbr.rel (%p372) target = $region52
      $region51: #{tpu_custom_call.1} parent=5 // pred_region
        %s375 = ssub.s32 %s22, 2
        // Predicated region
        $region53: #{tpu_custom_call.1} parent=51 // pred_check
          %p376 = pneg %p140
        $region54: #{tpu_custom_call.1} parent=51 // pred_check_branch
          %378 = sbr.rel (%p376) target = $region56
        $region55: #{tpu_custom_call.1} parent=51 // pred_region
          %s379 = sand.u32 %s125, 1
          %s380 = scalar_lea.sflag [#allocation4], %s379
          %s381 = sand.u32 %s125, 1
          %s382 = smul.addr %s381, 8
          %s383 = scalar_lea.vmem [#allocation7], %s382
          %384 = dma.done %s380, 128
        $region56: #{tpu_custom_call.1} parent=51 // pred_fallthru
          _
        // Predicated region
        $region57: #{tpu_custom_call.1} parent=51 // pred_check
          %p385 = pneg %p168
        $region58: #{tpu_custom_call.1} parent=51 // pred_check_branch
          %387 = sbr.rel (%p385) target = $region60
        $region59: #{tpu_custom_call.1} parent=51 // pred_region
          %s388 = sand.u32 %s153, 1
          %s389 = scalar_lea.sflag [#allocation9], %s388
          %s390 = sand.u32 %s153, 1
          %s391 = smul.addr %s390, 8
          %s392 = scalar_lea.vmem [#allocation8], %s391
          %393 = dma.done %s389, 128
        $region60: #{tpu_custom_call.1} parent=51 // pred_fallthru
          _
      $region52: #{tpu_custom_call.1} parent=5 // pred_fallthru
        _
    $region6: #{tpu_custom_call.1} parent=1 // loop_footer
      %s26 = sadd.s32 1, %s22
    $region7: #{tpu_custom_call.1} parent=1 // loop_footer_branch
      %21 = sbr.rel target = $region3
    $region8: #{tpu_custom_call.1} parent=1 // loop_exit
      _
    %394 = vsyncpa [#allocation3], 1
    %s395 = scalar_lea.sflag [#allocation3], 1
    %396 = vsyncpa %s395, 1
    %397 = vsyncpa [#allocation6], 1
    %s398 = scalar_lea.sflag [#allocation6], 1
    %399 = vsyncpa %s398, 1
    %400 = vsyncpa [#allocation4], 1
    %s401 = scalar_lea.sflag [#allocation4], 1
    %402 = vsyncpa %s401, 1
    %403 = vsyncpa [#allocation9], 1
    %s404 = scalar_lea.sflag [#allocation9], 1
    %405 = vsyncpa %s404, 1

</llo_original>
